<compile_context>
chip_gen: v6e
topology: v6e:2x2x1
jax: 0.10.0
libtpu: 0.0.40
codegen_flags: <defaults>
</compile_context>

<pallas_src>
import functools

import jax
import jax.numpy as jnp
from jax.experimental import pallas as pl
from jax.experimental.pallas import tpu as pltpu


def _round_up(x, m):
    return (x + m - 1) // m * m


# --------------------------------- kernel ------------------------------------

def patch_embed_kernel(x_ref, w_ref, b_ref, o_ref):
    # x: (TM, K_pad) bf16, w: (K_pad, E_pad) bf16, b: (1, E_pad) f32
    acc = jnp.dot(x_ref[...], w_ref[...], preferred_element_type=jnp.float32)
    o_ref[...] = acc + b_ref[...]          # bias broadcast over rows; f32 store


# -------------------------------- wrapper ------------------------------------

def patch_embedding_forward(x, conv_w, conv_b, *, patch_size):
    """Pallas equivalent of PatchEmbedding.forward.

    x:       [B, C, H, W]  float32 (NCHW, like PyTorch)
    conv_w:  [E, C, P, P]  float32 (nn.Conv2d weight)
    conv_b:  [E]           float32 (nn.Conv2d bias)
    returns: [B, (H//P)*(W//P), E]  float32
    """
    B, C, H, W = x.shape
    P = patch_size
    assert H % P == 0 and W % P == 0, "image size must be divisible by patch size"
    nH, nW = H // P, W // P
    E = conv_w.shape[0]
    K = C * P * P
    M = B * nH * nW

    # ---- patch extraction (layout glue, no compute) ----
    patches = (x.reshape(B, C, nH, P, nW, P)
                 .transpose(0, 2, 4, 1, 3, 5)          # (B, nH, nW, C, P, P)
                 .reshape(M, K))

    # ---- lane-dense padding: K, E -> multiples of 128; M -> multiple of TM ----
    K_pad = _round_up(K, 128)
    E_pad = _round_up(E, 128)
    TM = min(256, _round_up(M, 8))                     # row-block size (sublane-aligned)
    M_pad = _round_up(M, TM)

    patches_p = (jnp.zeros((M_pad, K_pad), jnp.bfloat16)
                 .at[:M, :K].set(patches.astype(jnp.bfloat16)))
    w_p = (jnp.zeros((K_pad, E_pad), jnp.bfloat16)
           .at[:K, :E].set(conv_w.reshape(E, K).T.astype(jnp.bfloat16)))
    b_p = jnp.zeros((1, E_pad), jnp.float32).at[0, :E].set(conv_b)

    # Note: at ViT-Base scale the constant-index weight spec could additionally
    # use pipeline_mode=pl.Buffered(1) to halve its VMEM footprint; at this
    # size (256x128 bf16 = 64 KiB) default double-buffering is negligible.
    out = pl.pallas_call(
        patch_embed_kernel,
        grid=(M_pad // TM,),
        in_specs=[
            pl.BlockSpec((TM, K_pad), lambda i: (i, 0)),     # patch rows: tiled over M
            pl.BlockSpec((K_pad, E_pad), lambda i: (0, 0)),  # weight: VMEM-resident
            pl.BlockSpec((1, E_pad), lambda i: (0, 0)),      # bias: VMEM-resident
        ],
        out_specs=pl.BlockSpec((TM, E_pad), lambda i: (i, 0)),
        out_shape=jax.ShapeDtypeStruct((M_pad, E_pad), jnp.float32),
        compiler_params=pltpu.CompilerParams(dimension_semantics=("parallel",)),
    )(patches_p, w_p, b_p)

    # strip padding, reshape -> [B, num_patches, E]  (== flatten(2,3).permute(0,2,1))
    return out[:M, :E].reshape(B, nH * nW, E)


# ----------------------------------- main -------------------------------------

if __name__ == "__main__":
    # Small config that exercises both padding paths: K = 3*8*8 = 192 -> 256,
    # E = 32 -> 128, M = 2*2*2 = 8 rows.
    B, C, IMG, P, E = 2, 3, 16, 8, 32
    NP = (IMG // P) ** 2

    key = jax.random.PRNGKey(0)
    kx, kw, kb = jax.random.split(key, 3)
    x = jax.random.normal(kx, (B, C, IMG, IMG), jnp.float32)
    conv_w = jax.random.normal(kw, (E, C, P, P), jnp.float32) * 0.02
    conv_b = jax.random.normal(kb, (E,), jnp.float32) * 0.02

    fwd = jax.jit(functools.partial(patch_embedding_forward, patch_size=P))
    out = jax.block_until_ready(fwd(x, conv_w, conv_b))
    assert out.shape == (B, NP, E), out.shape

    # Pure-JAX f32 reference (same math as Conv2d(k=P, stride=P) + flatten + permute).
    ref_patches = (x.reshape(B, C, IMG // P, P, IMG // P, P)
                     .transpose(0, 2, 4, 1, 3, 5)
                     .reshape(B * NP, C * P * P))
    ref = (ref_patches @ conv_w.reshape(E, -1).T + conv_b).reshape(B, NP, E)
    max_err = float(jnp.max(jnp.abs(out - ref)))
    # bf16 matmul operands with f32 accumulation -> small drift vs f32 reference.
    assert max_err < 3e-2, f"max abs err {max_err}"

    print("KERNEL_OK")
</pallas_src>

<mosaic_0001>
module attributes {stable_mosaic.version = 11 : i64} {
  func.func @patch_embed_kernel(%arg0: i32, %arg1: memref<8x256xbf16, #tpu.memory_space<vmem>>, %arg2: memref<256x128xbf16, #tpu.memory_space<vmem>>, %arg3: memref<1x128xf32, #tpu.memory_space<vmem>>, %arg4: memref<8x128xf32, #tpu.memory_space<vmem>>) attributes {dimension_semantics = [#tpu.dimension_semantics<parallel>], iteration_bounds = array<i64: 1>, scalar_prefetch = 0 : i64, scratch_operands = 0 : i64, tpu.core_type = #tpu.core_type<tc>, window_params = [{transform_indices = @transform_0, window_bounds = array<i64: 8, 256>}, {pipeline_mode = #tpu.pipeline_mode<synchronous>, transform_indices = @transform_1, window_bounds = array<i64: 256, 128>}, {pipeline_mode = #tpu.pipeline_mode<synchronous>, transform_indices = @transform_2, window_bounds = array<i64: 1, 128>}, {transform_indices = @transform_3, window_bounds = array<i64: 8, 128>}]} {
    %c0 = arith.constant 0 : index
    %c0_0 = arith.constant 0 : index
    %0 = vector.load %arg1[%c0, %c0_0] : memref<8x256xbf16, #tpu.memory_space<vmem>>, vector<8x256xbf16>
    %c0_1 = arith.constant 0 : index
    %c0_2 = arith.constant 0 : index
    %1 = vector.load %arg2[%c0_1, %c0_2] : memref<256x128xbf16, #tpu.memory_space<vmem>>, vector<256x128xbf16>
    %cst = arith.constant dense<0.000000e+00> : vector<8x128xf32>
    %2 = tpu.matmul %0, %1, %cst {dimension_numbers = #tpu.dot_dimension_numbers<[1], [0], [0], [1], [0, 0, 1, 1], [], []>} : vector<8x256xbf16>, vector<256x128xbf16>, vector<8x128xf32> -> vector<8x128xf32>
    %c0_3 = arith.constant 0 : index
    %c0_4 = arith.constant 0 : index
    %3 = vector.load %arg3[%c0_3, %c0_4] : memref<1x128xf32, #tpu.memory_space<vmem>>, vector<1x128xf32>
    %4 = vector.broadcast %3 : vector<1x128xf32> to vector<8x128xf32>
    %5 = arith.addf %2, %4 : vector<8x128xf32>
    %c0_5 = arith.constant 0 : index
    %c0_6 = arith.constant 0 : index
    %6 = vector.load %arg4[%c0_5, %c0_6] : memref<8x128xf32, #tpu.memory_space<vmem>>, vector<8x128xf32>
    tpu.vector_store %arg4[%c0_5, %c0_6], %5 {strides = array<i32>} : memref<8x128xf32, #tpu.memory_space<vmem>>, vector<8x128xf32>,
    return
  }
  func.func @transform_0(%arg0: i32) -> (i32, i32) {
    %c0_i32 = arith.constant 0 : i32
    %c0_i32_0 = arith.constant 0 : i32
    return %arg0, %c0_i32 : i32, i32
  }
  func.func @transform_1(%arg0: i32) -> (i32, i32) {
    %c0_i32 = arith.constant 0 : i32
    %c0_i32_0 = arith.constant 0 : i32
    %c0_i32_1 = arith.constant 0 : i32
    return %c0_i32, %c0_i32_0 : i32, i32
  }
  func.func @transform_2(%arg0: i32) -> (i32, i32) {
    %c0_i32 = arith.constant 0 : i32
    %c0_i32_0 = arith.constant 0 : i32
    %c0_i32_1 = arith.constant 0 : i32
    return %c0_i32, %c0_i32_0 : i32, i32
  }
  func.func @transform_3(%arg0: i32) -> (i32, i32) {
    %c0_i32 = arith.constant 0 : i32
    %c0_i32_0 = arith.constant 0 : i32
    return %arg0, %c0_i32 : i32, i32
  }
}

</mosaic_0001>

<llo_original>
// kernel: patch_embedding_forward.1
$region0: #{patch_embedding_forward.1}
  #allocation0 [shape = 'u32[]', space=smem, size = 0x4, offset = 0x4, fixed_abs, tag = 'smem constant byte address 0x4 - core index']
  #allocation1 [shape = 'u32[144,128]{1,0:T(1,128)}', space=vmem, size = 0x12000, scoped, tag = 'internal scratch']
  %s0 = inlined_call_operand.vmem [shape: bf16[8,256], index: 0, kind: input, shape index: {}]
  %s1 = inlined_call_operand.vmem [shape: bf16[256,128], index: 1, kind: input, shape index: {}]
  %s2 = inlined_call_operand.vmem [shape: f32[1,128], index: 2, kind: input, shape index: {}]
  %s3 = inlined_call_operand.hbm [shape: f32[8,128], index: 3, kind: output, shape index: {}]
  %s4 = sld [smem:[#allocation0]]
  $region22: #{patch_embedding_forward.1} parent=0
    _
  %s6 = ssub.s32 1, %s4
  %s7 = scalar_select 0, %s6, %s4
  $region1: #{patch_embedding_forward.1} parent=0
    #allocation2 [shape = 'u8[4096]{0}', space=vmem, size = 0x1000, scoped, tag = 'output window, operand 0, single buffered']
    #allocation3 [shape = 's32[1]{0}', space=sflag, size = 0x4, scoped, tag = 'scoped memory for patch_embedding_forward.1']
    %8 = vsyncpa [#allocation3], 0
    // Predicated region
    $region2: #{patch_embedding_forward.1} parent=1 // pred_check
      _
    $region3: #{patch_embedding_forward.1} parent=1 // pred_check_branch
      %10 = sbr.rel (0) target = $region5
    $region4: #{patch_embedding_forward.1} parent=1 // pred_region
      _
    $region5: #{patch_embedding_forward.1} parent=1 // pred_fallthru
      _
    // Predicated region
    $region6: #{patch_embedding_forward.1} parent=1 // pred_check
      _
    $region7: #{patch_embedding_forward.1} parent=1 // pred_check_branch
      %12 = sbr.rel (0) target = $region9
    $region8: #{patch_embedding_forward.1} parent=1 // pred_region
      _
    $region9: #{patch_embedding_forward.1} parent=1 // pred_fallthru
      _
    // Predicated region
    $region10: #{patch_embedding_forward.1} parent=1 // pred_check
      _
    $region11: #{patch_embedding_forward.1} parent=1 // pred_check_branch
      %14 = sbr.rel (0) target = $region13
    $region12: #{patch_embedding_forward.1} parent=1 // pred_region
      _
    $region13: #{patch_embedding_forward.1} parent=1 // pred_fallthru
      _
    %v16 = vld [vmem:[%s0] sm:$0xff]
    %v17 = vld [vmem:[%s1] sm:$0xf]
    %v18 = vld [vmem:[%s1 + $0x4] sm:$0xf]
    %v19 = vld [vmem:[%s1 + $0x8] sm:$0xf]
    %v20 = vld [vmem:[%s1 + $0xc] sm:$0xf]
    %v21 = vld [vmem:[%s1 + $0x10] sm:$0xf]
    %v22 = vld [vmem:[%s1 + $0x14] sm:$0xf]
    %v23 = vld [vmem:[%s1 + $0x18] sm:$0xf]
    %v24 = vld [vmem:[%s1 + $0x1c] sm:$0xf]
    %v25 = vld [vmem:[%s1 + $0x20] sm:$0xf]
    %v26 = vld [vmem:[%s1 + $0x24] sm:$0xf]
    %v27 = vld [vmem:[%s1 + $0x28] sm:$0xf]
    %v28 = vld [vmem:[%s1 + $0x2c] sm:$0xf]
    %v29 = vld [vmem:[%s1 + $0x30] sm:$0xf]
    %v30 = vld [vmem:[%s1 + $0x34] sm:$0xf]
    %v31 = vld [vmem:[%s1 + $0x38] sm:$0xf]
    %v32 = vld [vmem:[%s1 + $0x3c] sm:$0xf]
    %v33 = vld [vmem:[%s1 + $0x40] sm:$0xf]
    %v34 = vld [vmem:[%s1 + $0x44] sm:$0xf]
    %v35 = vld [vmem:[%s1 + $0x48] sm:$0xf]
    %v36 = vld [vmem:[%s1 + $0x4c] sm:$0xf]
    %v37 = vld [vmem:[%s1 + $0x50] sm:$0xf]
    %v38 = vld [vmem:[%s1 + $0x54] sm:$0xf]
    %v39 = vld [vmem:[%s1 + $0x58] sm:$0xf]
    %v40 = vld [vmem:[%s1 + $0x5c] sm:$0xf]
    %v41 = vld [vmem:[%s1 + $0x60] sm:$0xf]
    %v42 = vld [vmem:[%s1 + $0x64] sm:$0xf]
    %v43 = vld [vmem:[%s1 + $0x68] sm:$0xf]
    %v44 = vld [vmem:[%s1 + $0x6c] sm:$0xf]
    %v45 = vld [vmem:[%s1 + $0x70] sm:$0xf]
    %v46 = vld [vmem:[%s1 + $0x74] sm:$0xf]
    %v47 = vld [vmem:[%s1 + $0x78] sm:$0xf]
    %v48 = vld [vmem:[%s1 + $0x7c] sm:$0xf]
    %v49 = vld [vmem:[%s2] sm:$0x1]
    %v51 = vlaneseq
    %v52 = vshrl.u32 %v51, 7
    %v53 = vsub.s32 0, %v52
    %v54 = vrot.slane %v49, %v53
    %v57 = vunpack.c.l.b16 %v16
    %v58 = vunpack.c.h.b16 %v16
    %v59 = vpack.c.b16 %v57, %v57
    %v60 = vpack.c.b16 %v58, %v58
    %v95 = vunpack.c.l.b16 %v17
    %v96 = vunpack.c.l.b16 %v18
    %v97 = vunpack.c.l.b16 %v19
    %v98 = vunpack.c.l.b16 %v20
    %v99 = vunpack.c.l.b16 %v21
    %v100 = vunpack.c.l.b16 %v22
    %v101 = vunpack.c.l.b16 %v23
    %v102 = vunpack.c.l.b16 %v24
    %v103 = vunpack.c.l.b16 %v25
    %v104 = vunpack.c.l.b16 %v26
    %v105 = vunpack.c.l.b16 %v27
    %v106 = vunpack.c.l.b16 %v28
    %v107 = vunpack.c.l.b16 %v29
    %v108 = vunpack.c.l.b16 %v30
    %v109 = vunpack.c.l.b16 %v31
    %v110 = vunpack.c.l.b16 %v32
    %v111 = vunpack.c.l.b16 %v33
    %v112 = vunpack.c.l.b16 %v34
    %v113 = vunpack.c.l.b16 %v35
    %v114 = vunpack.c.l.b16 %v36
    %v115 = vunpack.c.l.b16 %v37
    %v116 = vunpack.c.l.b16 %v38
    %v117 = vunpack.c.l.b16 %v39
    %v118 = vunpack.c.l.b16 %v40
    %v119 = vunpack.c.l.b16 %v41
    %v120 = vunpack.c.l.b16 %v42
    %v121 = vunpack.c.l.b16 %v43
    %v122 = vunpack.c.l.b16 %v44
    %v123 = vunpack.c.l.b16 %v45
    %v124 = vunpack.c.l.b16 %v46
    %v125 = vunpack.c.l.b16 %v47
    %v126 = vunpack.c.l.b16 %v48
    %v127 = vpack.c.b16 %v96, %v95
    %v128 = vpack.c.b16 %v98, %v97
    %v129 = vpack.c.b16 %v100, %v99
    %v130 = vpack.c.b16 %v102, %v101
    %v131 = vpack.c.b16 %v104, %v103
    %v132 = vpack.c.b16 %v106, %v105
    %v133 = vpack.c.b16 %v108, %v107
    %v134 = vpack.c.b16 %v110, %v109
    %v135 = vpack.c.b16 %v112, %v111
    %v136 = vpack.c.b16 %v114, %v113
    %v137 = vpack.c.b16 %v116, %v115
    %v138 = vpack.c.b16 %v118, %v117
    %v139 = vpack.c.b16 %v120, %v119
    %v140 = vpack.c.b16 %v122, %v121
    %v141 = vpack.c.b16 %v124, %v123
    %v142 = vpack.c.b16 %v126, %v125
    %159 = vmatprep.subr.bf16.mxu0 0
    %160 = vmatpush1.bf16.msra.mxu0 %v134
    %161 = vmatprep.subr.bf16.mxu0 0
    %162 = vmatpush1.bf16.msra.mxu0 %v133
    %163 = vmatprep.subr.bf16.mxu0 0
    %164 = vmatpush1.bf16.msra.mxu0 %v132
    %165 = vmatprep.subr.bf16.mxu0 0
    %166 = vmatpush1.bf16.msra.mxu0 %v131
    %167 = vmatprep.subr.bf16.mxu0 0
    %168 = vmatpush1.bf16.msra.mxu0 %v130
    %169 = vmatprep.subr.bf16.mxu0 0
    %170 = vmatpush1.bf16.msra.mxu0 %v129
    %171 = vmatprep.subr.bf16.mxu0 0
    %172 = vmatpush1.bf16.msra.mxu0 %v128
    %173 = vmatprep.subr.bf16.mxu0 0
    %174 = vmatpush1.bf16.msra.mxu0 %v127
    %175 = vmatprep.subr.bf16.mxu0 0
    %176 = vmatpush2.bf16.msra.mxu0 %v142
    %177 = vmatprep.subr.bf16.mxu0 0
    %178 = vmatpush2.bf16.msra.mxu0 %v141
    %179 = vmatprep.subr.bf16.mxu0 0
    %180 = vmatpush2.bf16.msra.mxu0 %v140
    %181 = vmatprep.subr.bf16.mxu0 0
    %182 = vmatpush2.bf16.msra.mxu0 %v139
    %183 = vmatprep.subr.bf16.mxu0 0
    %184 = vmatpush2.bf16.msra.mxu0 %v138
    %185 = vmatprep.subr.bf16.mxu0 0
    %186 = vmatpush2.bf16.msra.mxu0 %v137
    %187 = vmatprep.subr.bf16.mxu0 0
    %188 = vmatpush2.bf16.msra.mxu0 %v136
    %189 = vmatprep.subr.bf16.mxu0 0
    %190 = vmatpush2.bf16.msra.mxu0 %v135
    %191 = vmatprep.mubr.bf16.mxu0 %v60
    %192 = vmatmul.mubr.bf16.gmra.mxu0 %v59
    %v193 = vpop.f32.mrf.mxu0
    %v194 = vadd.f32 %v54, %v193
    %v195 = vpop.f32.mrf.mxu0
    %v196 = vpop.f32.mrf.mxu0
    %v197 = vpop.f32.mrf.mxu0
    %198 = vdwg.mxu0
    %199 = vst [vmem:[#allocation2] sm:$0xff] %v194
    // Predicated region
    $region14: #{patch_embedding_forward.1} parent=1 // pred_check
      _
    $region15: #{patch_embedding_forward.1} parent=1 // pred_check_branch
      %201 = sbr.rel (0) target = $region17
    $region16: #{patch_embedding_forward.1} parent=1 // pred_region
      %s203 = ssub.s32 128, 128
      %204 = vsyncadd [#allocation3], %s203
      %s206 = sshll.u32 [#allocation2], 4
      %s207 = int_to_ptr.vmem [resolvable:$true] %s206
      %209 = dma.vmem_to_hbm [thread:$0]  %s207, 128, %s3, [#allocation3]
    $region17: #{patch_embedding_forward.1} parent=1 // pred_fallthru
      _
    // Predicated region
    $region18: #{patch_embedding_forward.1} parent=1 // pred_check
      _
    $region19: #{patch_embedding_forward.1} parent=1 // pred_check_branch
      %211 = sbr.rel (0) target = $region21
    $region20: #{patch_embedding_forward.1} parent=1 // pred_region
      %212 = dma.done [#allocation3], 128
    $region21: #{patch_embedding_forward.1} parent=1 // pred_fallthru
      _
    %213 = vsyncpa [#allocation3], 1

</llo_original>
